<compile_context>
chip_gen: v7x
topology: tpu7x:2x2x1
jax: 0.10.0
libtpu: 0.0.40
codegen_flags: <defaults>
</compile_context>

<pallas_src>
import math
from functools import partial

import jax
import jax.numpy as jnp
from jax.experimental import pallas as pl
from jax.experimental.pallas import tpu as pltpu


# ----------------------------------------------------------------------------
# Zeros kernel (Pallas equivalent of the `Zeros` module: torch.zeros(shape)).
# ----------------------------------------------------------------------------

_TILE_BYTES = 2 * 1024 * 1024  # ~2 MiB per output tile: double-buffered output
                               # stays well inside the scoped-VMEM default on
                               # v5e (16 MiB) / v6e (32 MiB) / v7x (32 MiB).


def _zeros_kernel(o_ref):
    o_ref[...] = jnp.zeros_like(o_ref)


def _lane_dense_flat_shape(total):
    """Factor `total` into (rows, cols) with a lane-friendly layout.

    Layout is free (the output is all zeros), so prefer cols = wide multiple of
    128 (unmasked vst) while keeping rows >= 8 (full sublane utilization).
    """
    if total % 128 == 0:
        cols = 128
        while (cols < 32768
               and total % (cols * 2) == 0
               and total // (cols * 2) >= 8):
            cols *= 2
        return total // cols, cols
    if total % 8 == 0:
        # At least fill all 8 sublanes of each vreg.
        return 8, total // 8
    # Odd remainder: single-row fallback.
    return 1, total


def zeros_pallas(output_dim, dtype=jnp.float32):
    """torch.zeros(output_dim) computed by a tiled, lane-dense Pallas kernel."""
    if isinstance(output_dim, int):
        shape = (int(output_dim),)
    else:
        shape = tuple(int(d) for d in output_dim)
    total = math.prod(shape) if len(shape) > 0 else 1

    if total == 0:
        # Empty tensor: nothing to fill, no kernel needed.
        return jnp.zeros(shape, dtype)

    itemsize = jnp.dtype(dtype).itemsize
    rows, cols = _lane_dense_flat_shape(total)
    tile_elems = max(1, _TILE_BYTES // itemsize)

    if rows * cols * itemsize <= _TILE_BYTES:
        # Small output: one full-extent block, single grid step.
        grid = (1,)
        block = (rows, cols)
        index_map = lambda i: (0, 0)
    elif cols % 128 == 0:
        # Lane-dense layout: tile along rows at ~_TILE_BYTES per tile.
        tm = max(8, (tile_elems // cols) // 8 * 8)
        tm = min(tm, rows)
        grid = (pl.cdiv(rows, tm),)
        block = (tm, cols)
        index_map = lambda i: (i, 0)
    else:
        # rows in {1, 8} and cols not 128-divisible: tile along cols instead
        # (block last dim is a multiple of 128; the partial edge is masked).
        tc = max(128, (tile_elems // rows) // 128 * 128)
        grid = (pl.cdiv(cols, tc),)
        block = (rows, tc)
        index_map = lambda i: (0, i)

    out = pl.pallas_call(
        _zeros_kernel,
        out_shape=jax.ShapeDtypeStruct((rows, cols), dtype),
        grid=grid,
        out_specs=pl.BlockSpec(block, index_map),
        compiler_params=pltpu.CompilerParams(
            dimension_semantics=("parallel",)),  # shard across TCs on v7x
    )()
    return out.reshape(shape)


# ----------------------------------------------------------------------------
# Fused linear kernel: act((x @ W + b) * row_scale + row_shift) [+ zeros out]
# ----------------------------------------------------------------------------

def _linear_affine_kernel(x_ref, w_ref, b_ref, s_ref, t_ref, o_ref, *z_refs,
                          activation):
    y = jnp.dot(x_ref[...], w_ref[...], preferred_element_type=jnp.float32)
    y = (y + b_ref[...]) * s_ref[...] + t_ref[...]
    if activation == "relu":
        y = jnp.maximum(y, 0.0)
    elif activation == "exp":
        y = jnp.exp(y)
    o_ref[...] = y.astype(o_ref.dtype)
    for z_ref in z_refs:            # fused zero-fill (deterministic logvars)
        z_ref[...] = jnp.zeros_like(z_ref)


def linear_pallas(x2d, w, b, *, row_scale=None, row_shift=None, activation=None,
                  emit_zeros=False, out_dtype=None):
    """Row-tiled fused linear: act((x2d @ w + b) * row_scale + row_shift).

    x2d: (M, K); w: (K, N); b: (N,); row_scale/row_shift: (M,) or None.
    If emit_zeros, also returns a second all-zero (M, N) output from the same
    kernel (avoids a separate zeros launch for the deterministic path).
    """
    M, K = x2d.shape
    K2, N = w.shape
    assert K == K2
    out_dtype = out_dtype or x2d.dtype
    if row_scale is None:
        row_scale = jnp.ones((M,), jnp.float32)
    if row_shift is None:
        row_shift = jnp.zeros((M,), jnp.float32)
    b2 = b.reshape(1, N).astype(jnp.float32)
    s2 = row_scale.reshape(M, 1).astype(jnp.float32)
    t2 = row_shift.reshape(M, 1).astype(jnp.float32)

    # Row tiling: full-extent block for small M, 8-aligned 256-row tiles otherwise.
    tm = M if M <= 256 else 256
    grid = (pl.cdiv(M, tm),)

    out_shape = jax.ShapeDtypeStruct((M, N), out_dtype)
    out_spec = pl.BlockSpec((tm, N), lambda i: (i, 0))
    if emit_zeros:
        out_shape = (out_shape, jax.ShapeDtypeStruct((M, N), out_dtype))
        out_spec = (out_spec, pl.BlockSpec((tm, N), lambda i: (i, 0)))

    return pl.pallas_call(
        partial(_linear_affine_kernel, activation=activation),
        out_shape=out_shape,
        grid=grid,
        in_specs=[
            pl.BlockSpec((tm, K), lambda i: (i, 0)),   # x rows
            pl.BlockSpec((K, N), lambda i: (0, 0)),    # weight (resident)
            pl.BlockSpec((1, N), lambda i: (0, 0)),    # bias
            pl.BlockSpec((tm, 1), lambda i: (i, 0)),   # per-row BN scale
            pl.BlockSpec((tm, 1), lambda i: (i, 0)),   # per-row BN shift
        ],
        out_specs=out_spec,
        compiler_params=pltpu.CompilerParams(
            dimension_semantics=("parallel",)),
    )(x2d, w, b2, s2, t2)


# ----------------------------------------------------------------------------
# Parameter init (mirrors torch defaults closely enough for verification)
# ----------------------------------------------------------------------------

def _init_linear(key, fan_in, fan_out):
    kw, kb = jax.random.split(key)
    bound = 1.0 / math.sqrt(fan_in)
    w = jax.random.uniform(kw, (fan_in, fan_out), jnp.float32, -bound, bound)
    b = jax.random.uniform(kb, (fan_out,), jnp.float32, -bound, bound)
    return w, b


def _init_bn(key, T):
    k1, k2, k3, k4 = jax.random.split(key, 4)
    return dict(
        gamma=1.0 + 0.1 * jax.random.normal(k1, (T,), jnp.float32),
        beta=0.1 * jax.random.normal(k2, (T,), jnp.float32),
        mean=0.1 * jax.random.normal(k3, (T,), jnp.float32),
        var=1.0 + 0.5 * jax.random.uniform(k4, (T,), jnp.float32),
        eps=1e-5,
    )


def _init_mlp(key, input_dim, hidden_dim, output_dim, n_layers, T):
    keys = jax.random.split(key, 2 * (n_layers + 2))
    dims = [input_dim] + [hidden_dim] * (n_layers + 1) + [output_dim]
    linears, bns = [], ([] if T is not None else None)
    for li in range(n_layers + 2):
        linears.append(_init_linear(keys[2 * li], dims[li], dims[li + 1]))
        if T is not None and li < n_layers + 1:
            bns.append(_init_bn(keys[2 * li + 1], T))
    return linears, bns


def _bn_to_row_affine(bn, n_batch):
    """Fold eval-mode BatchNorm1d(T) into a per-row (N*T rows) affine."""
    scale = bn["gamma"] / jnp.sqrt(bn["var"] + bn["eps"])
    shift = bn["beta"] - bn["mean"] * scale
    return jnp.tile(scale, n_batch), jnp.tile(shift, n_batch)


def _mlp_forward_pallas(linears, bns, x2, T, final_activation):
    h = x2
    n_batch = (x2.shape[0] // T) if bns is not None else None
    for li in range(len(linears) - 1):
        w, b = linears[li]
        if bns is not None:
            rs, rt = _bn_to_row_affine(bns[li], n_batch)
        else:
            rs = rt = None
        h = linear_pallas(h, w, b, row_scale=rs, row_shift=rt, activation="relu")
    w, b = linears[-1]
    return linear_pallas(h, w, b, activation=final_activation)


# ----------------------------------------------------------------------------
# StructuredEncoder
# ----------------------------------------------------------------------------

class StructuredEncoderPallas:
    """JAX/Pallas port of the PyTorch StructuredEncoder forward pass."""

    def __init__(self, input_dim, hidden_dim, output_dim, T=4, n_layers=1,
                 activation="relu", deterministic=False, linear_encoding=True,
                 key=None):
        if activation != "relu":
            raise NotImplementedError("only relu activation (as in the spec)")
        key = jax.random.PRNGKey(0) if key is None else key
        self.input_dim, self.hidden_dim, self.output_dim = input_dim, hidden_dim, output_dim
        self.T, self.n_layers = T, n_layers
        self.deterministic = deterministic
        self.linear_encoding = linear_encoding

        k_mean, k_lv = jax.random.split(key)
        if linear_encoding:
            self.mean_linears = [_init_linear(k_mean, input_dim, output_dim)]
            self.mean_bns = None
        else:
            self.mean_linears, self.mean_bns = _init_mlp(
                k_mean, input_dim, hidden_dim, output_dim, n_layers, T=None)
        if deterministic:
            self.lv_linears, self.lv_bns = None, None
        else:
            self.lv_linears, self.lv_bns = _init_mlp(
                k_lv, input_dim, hidden_dim, output_dim, n_layers, T=T)

    def __call__(self, x):
        lead = x.shape[:-1]
        x2 = x.reshape(-1, self.input_dim).astype(jnp.float32)

        enc_vars = None
        if self.linear_encoding:
            w, b = self.mean_linears[0]
            if self.deterministic:
                # Fuse the zero logvars into the mean kernel (one launch).
                mean2, zeros2 = linear_pallas(x2, w, b, emit_zeros=True)
                enc_vars = zeros2.reshape(lead + (self.output_dim,))
            else:
                mean2 = linear_pallas(x2, w, b)
        else:
            mean2 = _mlp_forward_pallas(self.mean_linears, None, x2, None, None)
        mean = mean2.reshape(lead + (self.output_dim,))

        if self.deterministic:
            if enc_vars is None:
                enc_vars = zeros_pallas(mean.shape)
        else:
            assert x.ndim >= 2 and x.shape[-2] == self.T, \
                "BatchNorm1d(T) expects x shaped (..., T, input_dim)"
            v2 = _mlp_forward_pallas(self.lv_linears, self.lv_bns, x2, self.T,
                                     final_activation="exp")
            enc_vars = v2.reshape(lead + (self.output_dim,))
        return mean, enc_vars


# ----------------------------------------------------------------------------
# Pure-JAX reference for verification
# ----------------------------------------------------------------------------

def _ref_forward(enc, x):
    lead = x.shape[:-1]
    x2 = x.reshape(-1, enc.input_dim).astype(jnp.float32)

    def mlp_ref(linears, bns, h, final_act):
        M = h.shape[0]
        for li in range(len(linears) - 1):
            w, b = linears[li]
            h = h @ w + b
            if bns is not None:
                rs, rt = _bn_to_row_affine(bns[li], M // enc.T)
                h = h * rs[:, None] + rt[:, None]
            h = jnp.maximum(h, 0.0)
        w, b = linears[-1]
        h = h @ w + b
        if final_act == "exp":
            h = jnp.exp(h)
        return h

    if enc.linear_encoding:
        w, b = enc.mean_linears[0]
        mean2 = x2 @ w + b
    else:
        mean2 = mlp_ref(enc.mean_linears, None, x2, None)
    mean = mean2.reshape(lead + (enc.output_dim,))

    if enc.deterministic:
        vars_ = jnp.zeros(mean.shape, jnp.float32)
    else:
        vars_ = mlp_ref(enc.lv_linears, enc.lv_bns, x2, "exp").reshape(
            lead + (enc.output_dim,))
    return mean, vars_


if __name__ == "__main__":
    key = jax.random.PRNGKey(0)
    k_x, k_enc = jax.random.split(key)
    batch, T, input_dim, hidden_dim, output_dim = 2, 4, 16, 32, 8
    x = jax.random.normal(k_x, (batch, T, input_dim), jnp.float32)

    # Stochastic path (module default): mean = Linear(x), vars = exp(mlp(x)).
    enc = StructuredEncoderPallas(input_dim, hidden_dim, output_dim, T=T,
                                  n_layers=1, deterministic=False,
                                  linear_encoding=True, key=k_enc)
    mean, enc_vars = enc(x)
    jax.block_until_ready((mean, enc_vars))
    ref_mean, ref_vars = _ref_forward(enc, x)
    assert mean.shape == (batch, T, output_dim)
    assert enc_vars.shape == (batch, T, output_dim)
    # Loose tolerance: TPU matmul precision may differ between Mosaic and XLA.
    assert jnp.allclose(mean, ref_mean, atol=2e-2, rtol=2e-2)
    assert jnp.allclose(enc_vars, ref_vars, atol=2e-2, rtol=2e-2)
    assert bool(jnp.all(enc_vars > 0.0))

    # Deterministic path: logvars come from the fused zero-fill output.
    enc_det = StructuredEncoderPallas(input_dim, hidden_dim, output_dim, T=T,
                                      n_layers=1, deterministic=True,
                                      linear_encoding=True, key=k_enc)
    mean_d, vars_d = enc_det(x)
    jax.block_until_ready((mean_d, vars_d))
    ref_mean_d, _ = _ref_forward(enc_det, x)
    assert jnp.allclose(mean_d, ref_mean_d, atol=2e-2, rtol=2e-2)
    assert vars_d.shape == mean_d.shape and bool(jnp.all(vars_d == 0.0))

    # Exercise the standalone (improved) Zeros kernel, including the tiled
    # multi-step grid path and the odd-shape fallback path.
    z_small = zeros_pallas((2, 4, 16, 16))       # lane-dense single block
    z_big = zeros_pallas((1024, 1024))           # 4 MiB > 2 MiB tile -> row grid
    z_odd = zeros_pallas((3, 5, 7))              # odd total -> fallback layout
    jax.block_until_ready((z_small, z_big, z_odd))
    assert z_small.shape == (2, 4, 16, 16) and bool(jnp.all(z_small == 0.0))
    assert z_big.shape == (1024, 1024) and bool(jnp.all(z_big == 0.0))
    assert z_odd.shape == (3, 5, 7) and bool(jnp.all(z_odd == 0.0))

    print("KERNEL_OK")
</pallas_src>

<mosaic_0001>
module attributes {stable_mosaic.version = 11 : i64} {
  func.func @_linear_affine_kernel(%arg0: i32, %arg1: memref<8x16xf32, #tpu.memory_space<vmem>>, %arg2: memref<16x8xf32, #tpu.memory_space<vmem>>, %arg3: memref<1x8xf32, #tpu.memory_space<vmem>>, %arg4: memref<8x1xf32, #tpu.memory_space<vmem>>, %arg5: memref<8x1xf32, #tpu.memory_space<vmem>>, %arg6: memref<8x8xf32, #tpu.memory_space<vmem>>) attributes {dimension_semantics = [#tpu.dimension_semantics<parallel>], iteration_bounds = array<i64: 1>, scalar_prefetch = 0 : i64, scratch_operands = 0 : i64, tpu.core_type = #tpu.core_type<tc>, window_params = [{transform_indices = @transform_0, window_bounds = array<i64: 8, 16>}, {pipeline_mode = #tpu.pipeline_mode<synchronous>, transform_indices = @transform_1, window_bounds = array<i64: 16, 8>}, {pipeline_mode = #tpu.pipeline_mode<synchronous>, transform_indices = @transform_2, window_bounds = array<i64: 1, 8>}, {transform_indices = @transform_3, window_bounds = array<i64: 8, 1>}, {transform_indices = @transform_4, window_bounds = array<i64: 8, 1>}, {transform_indices = @transform_5, window_bounds = array<i64: 8, 8>}]} {
    %c0 = arith.constant 0 : index
    %c0_0 = arith.constant 0 : index
    %0 = vector.load %arg1[%c0, %c0_0] : memref<8x16xf32, #tpu.memory_space<vmem>>, vector<8x16xf32>
    %c0_1 = arith.constant 0 : index
    %c0_2 = arith.constant 0 : index
    %1 = vector.load %arg2[%c0_1, %c0_2] : memref<16x8xf32, #tpu.memory_space<vmem>>, vector<16x8xf32>
    %cst = arith.constant dense<0.000000e+00> : vector<8x8xf32>
    %2 = tpu.matmul %0, %1, %cst {dimension_numbers = #tpu.dot_dimension_numbers<[1], [0], [0], [1], [0, 0, 1, 1], [], []>} : vector<8x16xf32>, vector<16x8xf32>, vector<8x8xf32> -> vector<8x8xf32>
    %c0_3 = arith.constant 0 : index
    %c0_4 = arith.constant 0 : index
    %3 = vector.load %arg3[%c0_3, %c0_4] : memref<1x8xf32, #tpu.memory_space<vmem>>, vector<1x8xf32>
    %4 = vector.broadcast %3 : vector<1x8xf32> to vector<8x8xf32>
    %5 = arith.addf %2, %4 : vector<8x8xf32>
    %c0_5 = arith.constant 0 : index
    %c0_6 = arith.constant 0 : index
    %6 = vector.load %arg4[%c0_5, %c0_6] : memref<8x1xf32, #tpu.memory_space<vmem>>, vector<8x1xf32>
    %7 = vector.broadcast %6 : vector<8x1xf32> to vector<8x8xf32>
    %8 = arith.mulf %5, %7 : vector<8x8xf32>
    %c0_7 = arith.constant 0 : index
    %c0_8 = arith.constant 0 : index
    %9 = vector.load %arg5[%c0_7, %c0_8] : memref<8x1xf32, #tpu.memory_space<vmem>>, vector<8x1xf32>
    %10 = vector.broadcast %9 : vector<8x1xf32> to vector<8x8xf32>
    %11 = arith.addf %8, %10 : vector<8x8xf32>
    %c0_9 = arith.constant 0 : index
    %c0_10 = arith.constant 0 : index
    %12 = vector.load %arg6[%c0_9, %c0_10] : memref<8x8xf32, #tpu.memory_space<vmem>>, vector<8x8xf32>
    tpu.vector_store %arg6[%c0_9, %c0_10], %11 {strides = array<i32>} : memref<8x8xf32, #tpu.memory_space<vmem>>, vector<8x8xf32>,
    return
  }
  func.func @transform_0(%arg0: i32) -> (i32, i32) {
    %c0_i32 = arith.constant 0 : i32
    %c0_i32_0 = arith.constant 0 : i32
    return %arg0, %c0_i32 : i32, i32
  }
  func.func @transform_1(%arg0: i32) -> (i32, i32) {
    %c0_i32 = arith.constant 0 : i32
    %c0_i32_0 = arith.constant 0 : i32
    %c0_i32_1 = arith.constant 0 : i32
    return %c0_i32, %c0_i32_0 : i32, i32
  }
  func.func @transform_2(%arg0: i32) -> (i32, i32) {
    %c0_i32 = arith.constant 0 : i32
    %c0_i32_0 = arith.constant 0 : i32
    %c0_i32_1 = arith.constant 0 : i32
    return %c0_i32, %c0_i32_0 : i32, i32
  }
  func.func @transform_3(%arg0: i32) -> (i32, i32) {
    %c0_i32 = arith.constant 0 : i32
    %c0_i32_0 = arith.constant 0 : i32
    return %arg0, %c0_i32 : i32, i32
  }
  func.func @transform_4(%arg0: i32) -> (i32, i32) {
    %c0_i32 = arith.constant 0 : i32
    %c0_i32_0 = arith.constant 0 : i32
    return %arg0, %c0_i32 : i32, i32
  }
  func.func @transform_5(%arg0: i32) -> (i32, i32) {
    %c0_i32 = arith.constant 0 : i32
    %c0_i32_0 = arith.constant 0 : i32
    return %arg0, %c0_i32 : i32, i32
  }
}

</mosaic_0001>

<llo_original>
// kernel: tpu_custom_call.1
$region0: #{tpu_custom_call.1}
  #allocation0 [shape = 'u32[]', space=smem, size = 0x4, offset = 0x4, fixed_abs, tag = 'smem constant byte address 0x4 - core index']
  #allocation1 [shape = 'u32[144,128]{1,0:T(1,128)}', space=vmem, size = 0x12000, scoped, tag = 'internal scratch']
  %s0 = inlined_call_operand.vmem [shape: f32[8,16], index: 0, kind: input, shape index: {}]
  %s1 = inlined_call_operand.vmem [shape: f32[16,8], index: 1, kind: input, shape index: {}]
  %s2 = inlined_call_operand.vmem [shape: f32[1,8], index: 2, kind: input, shape index: {}]
  %s3 = inlined_call_operand.vmem [shape: f32[8,1], index: 3, kind: input, shape index: {}]
  %s4 = inlined_call_operand.vmem [shape: f32[8,1], index: 4, kind: input, shape index: {}]
  %s5 = inlined_call_operand.hbm [shape: f32[8,8], index: 5, kind: output, shape index: {}]
  %s6 = sld [smem:[#allocation0]]
  $region30: #{tpu_custom_call.1} parent=0
    _
  %s8 = ssub.s32 1, %s6
  %s9 = scalar_select 0, %s8, %s6
  $region1: #{tpu_custom_call.1} parent=0
    #allocation2 [shape = 'u8[4096]{0}', space=vmem, size = 0x1000, scoped, tag = 'output window, operand 0, single buffered']
    #allocation3 [shape = 's32[1]{0}', space=sflag, size = 0x4, scoped, tag = 'scoped memory for tpu_custom_call.1']
    %10 = vsyncpa [#allocation3], 0
    // Predicated region
    $region2: #{tpu_custom_call.1} parent=1 // pred_check
      _
    $region3: #{tpu_custom_call.1} parent=1 // pred_check_branch
      %12 = sbr.rel (0) target = $region5
    $region4: #{tpu_custom_call.1} parent=1 // pred_region
      _
    $region5: #{tpu_custom_call.1} parent=1 // pred_fallthru
      _
    // Predicated region
    $region6: #{tpu_custom_call.1} parent=1 // pred_check
      _
    $region7: #{tpu_custom_call.1} parent=1 // pred_check_branch
      %14 = sbr.rel (0) target = $region9
    $region8: #{tpu_custom_call.1} parent=1 // pred_region
      _
    $region9: #{tpu_custom_call.1} parent=1 // pred_fallthru
      _
    // Predicated region
    $region10: #{tpu_custom_call.1} parent=1 // pred_check
      _
    $region11: #{tpu_custom_call.1} parent=1 // pred_check_branch
      %16 = sbr.rel (0) target = $region13
    $region12: #{tpu_custom_call.1} parent=1 // pred_region
      _
    $region13: #{tpu_custom_call.1} parent=1 // pred_fallthru
      _
    // Predicated region
    $region14: #{tpu_custom_call.1} parent=1 // pred_check
      _
    $region15: #{tpu_custom_call.1} parent=1 // pred_check_branch
      %18 = sbr.rel (0) target = $region17
    $region16: #{tpu_custom_call.1} parent=1 // pred_region
      _
    $region17: #{tpu_custom_call.1} parent=1 // pred_fallthru
      _
    // Predicated region
    $region18: #{tpu_custom_call.1} parent=1 // pred_check
      _
    $region19: #{tpu_custom_call.1} parent=1 // pred_check_branch
      %20 = sbr.rel (0) target = $region21
    $region20: #{tpu_custom_call.1} parent=1 // pred_region
      _
    $region21: #{tpu_custom_call.1} parent=1 // pred_fallthru
      _
    %v21 = vld [vmem:[%s0] sm:$0xff]
    %v22 = vld [vmem:[%s1] sm:$0xff]
    %v23 = vld [vmem:[%s1 + $0x8] sm:$0xff]
    %v24 = vld [vmem:[%s2] sm:$0x1]
    %v26 = vlaneseq
    %v27 = vshrl.u32 %v26, 7
    %v28 = vsub.s32 0, %v27
    %v29 = vrot.slane %v24, %v28
    %vm31 = vcmask 130048
    %v33 = vsel %vm31, %v21, 0
    %35 = vmatprep.subr.mxu0 0.0
    %36 = vmatpush1.msra.mxu0 %v22
    %37 = vmatprep.subr.mxu0 0.0
    %38 = vmatpush1.msra.mxu0 %v23
    %39 = vmatprep.subr.mxu0 0.0
    %40 = vmatpush1.msra.mxu0 0.0
    %41 = vmatprep.subr.mxu0 0.0
    %42 = vmatpush1.msra.mxu0 0.0
    %43 = vmatprep.subr.mxu0 0.0
    %44 = vmatpush1.msra.mxu0 0.0
    %45 = vmatprep.subr.mxu0 0.0
    %46 = vmatpush1.msra.mxu0 0.0
    %47 = vmatprep.subr.mxu0 0.0
    %48 = vmatpush1.msra.mxu0 0.0
    %49 = vmatprep.subr.mxu0 0.0
    %50 = vmatpush1.msra.mxu0 0.0
    %51 = vmatprep.subr.mxu0 0.0
    %52 = vmatpush1.msra.mxu0 0.0
    %53 = vmatprep.subr.mxu0 0.0
    %54 = vmatpush1.msra.mxu0 0.0
    %55 = vmatprep.subr.mxu0 0.0
    %56 = vmatpush1.msra.mxu0 0.0
    %57 = vmatprep.subr.mxu0 0.0
    %58 = vmatpush1.msra.mxu0 0.0
    %59 = vmatprep.subr.mxu0 0.0
    %60 = vmatpush1.msra.mxu0 0.0
    %61 = vmatprep.subr.mxu0 0.0
    %62 = vmatpush1.msra.mxu0 0.0
    %63 = vmatprep.subr.mxu0 0.0
    %64 = vmatpush1.msra.mxu0 0.0
    %65 = vmatprep.subr.mxu0 0.0
    %66 = vmatpush1.msra.mxu0 0.0
    %67 = vmatprep.subr.mxu0 0.0
    %68 = vmatpush1.msra.mxu0 0.0
    %69 = vmatprep.subr.mxu0 0.0
    %70 = vmatpush1.msra.mxu0 0.0
    %71 = vmatprep.subr.mxu0 0.0
    %72 = vmatpush1.msra.mxu0 0.0
    %73 = vmatprep.subr.mxu0 0.0
    %74 = vmatpush1.msra.mxu0 0.0
    %75 = vmatprep.subr.mxu0 0.0
    %76 = vmatpush1.msra.mxu0 0.0
    %77 = vmatprep.subr.mxu0 0.0
    %78 = vmatpush1.msra.mxu0 0.0
    %79 = vmatprep.subr.mxu0 0.0
    %80 = vmatpush1.msra.mxu0 0.0
    %81 = vmatprep.subr.mxu0 0.0
    %82 = vmatpush1.msra.mxu0 0.0
    %83 = vmatprep.subr.mxu0 0.0
    %84 = vmatpush1.msra.mxu0 0.0
    %85 = vmatprep.subr.mxu0 0.0
    %86 = vmatpush1.msra.mxu0 0.0
    %87 = vmatprep.subr.mxu0 0.0
    %88 = vmatpush1.msra.mxu0 0.0
    %89 = vmatprep.subr.mxu0 0.0
    %90 = vmatpush1.msra.mxu0 0.0
    %91 = vmatprep.subr.mxu0 0.0
    %92 = vmatpush1.msra.mxu0 0.0
    %93 = vmatprep.subr.mxu0 0.0
    %94 = vmatpush1.msra.mxu0 0.0
    %95 = vmatprep.subr.mxu0 0.0
    %96 = vmatpush1.msra.mxu0 0.0
    %97 = vmatprep.subr.mxu0 0.0
    %98 = vmatpush1.msra.mxu0 0.0
    %99 = vmatprep.mubr.f32.mxu0 0.0
    %100 = vmatmul.mubr.f32.gmra.mrb[0].mxu0 %v33
    %v101 = vpop.f32.mrb[0].mxu0
    %v102 = vadd.f32 %v29, %v101
    %v103 = vpop.f32.mrb[0].mxu0
    %104 = vdwg.mxu0
    %v105 = vld [vmem:[%s3] sm:$0xff]
    %107 = vset.pattern.permute.xlu0 0
    %108 = vperm.xlu0 %107, %v105
    %v109 = vpop.permute.xlu0 %108
    %v111 = vmul.f32 %v102, %v109
    %v112 = vld [vmem:[%s4] sm:$0xff]
    %114 = vset.pattern.permute.xlu0 0
    %115 = vperm.xlu0 %114, %v112
    %v116 = vpop.permute.xlu0 %115
    %v118 = vadd.f32 %v111, %v116
    %vm119 = vcmask 64512
    %120 = vst.msk [vmem:[#allocation2] sm:$0xff] %vm119, %v118
    // Predicated region
    $region22: #{tpu_custom_call.1} parent=1 // pred_check
      _
    $region23: #{tpu_custom_call.1} parent=1 // pred_check_branch
      %122 = sbr.rel (0) target = $region25
    $region24: #{tpu_custom_call.1} parent=1 // pred_region
      %s124 = ssub.s32 128, 128
      %125 = vsyncadd [#allocation3], %s124
      %s127 = sshll.u32 [#allocation2], 4
      %s128 = int_to_ptr.vmem [resolvable:$true] %s127
      %130 = dma.vmem_to_hbm [thread:$0]  %s128, 128, %s5, [#allocation3]
    $region25: #{tpu_custom_call.1} parent=1 // pred_fallthru
      _
    // Predicated region
    $region26: #{tpu_custom_call.1} parent=1 // pred_check
      _
    $region27: #{tpu_custom_call.1} parent=1 // pred_check_branch
      %132 = sbr.rel (0) target = $region29
    $region28: #{tpu_custom_call.1} parent=1 // pred_region
      %133 = dma.done [#allocation3], 128
    $region29: #{tpu_custom_call.1} parent=1 // pred_fallthru
      _
    %134 = vsyncpa [#allocation3], 1

</llo_original>
